<compile_context>
chip_gen: v7x
topology: tpu7x:2x2x1
jax: 0.10.0
libtpu: 0.0.40
codegen_flags: <defaults>
</compile_context>

<pallas_src>
import functools

import jax
import jax.numpy as jnp
from jax.experimental import pallas as pl
from jax.experimental.pallas import tpu as pltpu

W = 10.0
ALPHAS = [0.05]
SCORE_NAME = "quant"

_LANE = 128       # lane width
_MAX_TB = 512     # max lane-block width (multiple of 128); tiny VMEM footprint on all gens


def _make_score_kernel(alphas, batch, tb, padded):
    """Kernel computing sum_i mean(S_quant(v_i, e_i, X, alpha_i)) in one pass.

    alphas / batch / tb / padded are static Python values, so the alpha branch and the
    padding mask are resolved at trace time (matching the Python-level `if alpha < 0.5`
    in the PyTorch reference).
    """
    neg_half_w = float(-0.5 * W)

    def kernel(pv_ref, x_ref, loss_ref):
        step = pl.program_id(0)

        @pl.when(step == 0)
        def _():
            loss_ref[0, 0] = jnp.float32(0.0)

        x = x_ref[...]                                     # (1, TB) lane-dense batch
        if padded:
            lane = jax.lax.broadcasted_iota(jnp.int32, x.shape, 1) + step * tb
            valid = lane < batch

        inv_b = jnp.float32(1.0 / batch)
        partial = jnp.float32(0.0)
        for a_i, alpha in enumerate(alphas):
            v = pv_ref[2 * a_i:2 * a_i + 1, :]             # (1, TB)  VaR row
            e = pv_ref[2 * a_i + 1:2 * a_i + 2, :]         # (1, TB)  ES row

            # G1_quant(v) - G1_quant(x) = -W/2 * (v^2 - x^2) = -W/2 * (v-x)*(v+x)
            g1_diff = neg_half_w * (v - x) * (v + x)

            if alpha < 0.5:
                ind = (x <= v).astype(jnp.float32)
                # (1/alpha)*(alpha*e) == e ; G2in = alpha*e^2/2
                rt = ((ind - alpha) * g1_diff
                      + e * ind * (v - x)
                      + alpha * e * (e - v)
                      - (0.5 * alpha) * e * e)
            else:
                a_inv = 1.0 - alpha
                ind = (x >= v).astype(jnp.float32)
                # (1/a_inv)*(a_inv*(-e)) == -e ; G2in(-e) = a_inv*e^2/2
                rt = ((ind - a_inv) * g1_diff
                      - e * ind * (x - v)
                      - a_inv * e * (v - e)
                      - (0.5 * a_inv) * e * e)

            if padded:
                rt = jnp.where(valid, rt, 0.0)
            partial = partial + jnp.sum(rt) * inv_b        # mean over true batch

        loss_ref[0, 0] = loss_ref[0, 0] + partial

    return kernel


@jax.jit
def score_forward(pnl_validity: jax.Array, pnl: jax.Array) -> jax.Array:
    """Pallas equivalent of Score.forward(PNL_validity, PNL) for score='quant'."""
    assert SCORE_NAME == "quant"
    pnl_validity = jnp.asarray(pnl_validity, jnp.float32)
    pnl = jnp.asarray(pnl, jnp.float32)

    n_alphas = len(ALPHAS)
    rows = 2 * n_alphas
    batch = pnl_validity.shape[0]

    # Lane-dense layout: batch on the lane (last) axis.
    pv_t = pnl_validity.T                      # [2*n_alphas, B]
    x_t = pnl.reshape(1, batch)                # [1, B]  (PNL is [B, 1])

    # Lane-block width: multiple of 128, capped at _MAX_TB; pad batch to a multiple of it.
    b128 = pl.cdiv(batch, _LANE) * _LANE
    tb = _MAX_TB if b128 > _MAX_TB else b128
    b_padded = pl.cdiv(batch, tb) * tb
    padded = b_padded != batch
    if padded:
        pv_t = jnp.pad(pv_t, ((0, 0), (0, b_padded - batch)))
        x_t = jnp.pad(x_t, ((0, 0), (0, b_padded - batch)))

    kernel = _make_score_kernel(tuple(ALPHAS), batch, tb, padded)

    out = pl.pallas_call(
        kernel,
        out_shape=jax.ShapeDtypeStruct((1, 1), jnp.float32),
        grid=(b_padded // tb,),
        in_specs=[
            pl.BlockSpec((rows, tb), lambda i: (0, i)),     # [2*n_alphas, TB] block
            pl.BlockSpec((1, tb), lambda i: (0, i)),        # [1, TB] block
        ],
        out_specs=pl.BlockSpec((1, 1), lambda i: (0, 0),
                               memory_space=pltpu.MemorySpace.SMEM),
        compiler_params=pltpu.CompilerParams(
            dimension_semantics=("arbitrary",)),            # reduction axis
    )(pv_t, x_t)
    return out[0, 0]


def _score_reference(pnl_validity, pnl):
    """Pure-JAX reference (mirrors the PyTorch module) for correctness checking."""
    pnl_validity = jnp.asarray(pnl_validity, jnp.float32)
    pnl = jnp.asarray(pnl, jnp.float32)
    loss = jnp.float32(0.0)
    for i, alpha in enumerate(ALPHAS):
        v = pnl_validity[:, 2 * i:2 * i + 1]
        e = pnl_validity[:, 2 * i + 1:2 * i + 2]
        x = pnl
        g1_v = -W * v ** 2 / 2.0
        g1_x = -W * x ** 2 / 2.0
        if alpha < 0.5:
            ind = (x <= v).astype(jnp.float32)
            rt = ((ind - alpha) * (g1_v - g1_x)
                  + 1.0 / alpha * (alpha * e) * ind * (v - x)
                  + (alpha * e) * (e - v)
                  - alpha * e ** 2 / 2.0)
        else:
            a_inv = 1.0 - alpha
            ind = (x >= v).astype(jnp.float32)
            rt = ((ind - a_inv) * (g1_v - g1_x)
                  + 1.0 / a_inv * (a_inv * (-e)) * ind * (x - v)
                  + (a_inv * (-e)) * (v - e)
                  - a_inv * e ** 2 / 2.0)
        loss = loss + jnp.mean(rt)
    return loss


if __name__ == "__main__":
    # Primary check: small batch matching the module's usage.
    B = 8
    key = jax.random.PRNGKey(0)
    k1, k2 = jax.random.split(key)
    pnl_validity = jax.random.normal(k1, (B, 2 * len(ALPHAS)), dtype=jnp.float32)  # [B, 2]
    pnl = jax.random.normal(k2, (B, 1), dtype=jnp.float32)                          # [B, 1]

    loss = jax.block_until_ready(score_forward(pnl_validity, pnl))
    ref = _score_reference(pnl_validity, pnl)
    assert jnp.allclose(loss, ref, rtol=1e-5, atol=1e-5), (loss, ref)

    # Secondary check: batch not a multiple of 128 exercises the lane padding mask.
    B2 = 200
    k3, k4 = jax.random.split(jax.random.PRNGKey(1))
    pv2 = jax.random.normal(k3, (B2, 2 * len(ALPHAS)), dtype=jnp.float32)
    x2 = jax.random.normal(k4, (B2, 1), dtype=jnp.float32)
    loss2 = jax.block_until_ready(score_forward(pv2, x2))
    ref2 = _score_reference(pv2, x2)
    assert jnp.allclose(loss2, ref2, rtol=1e-5, atol=1e-5), (loss2, ref2)

    print("KERNEL_OK")
</pallas_src>

<mosaic_0001>
module attributes {stable_mosaic.version = 11 : i64} {
  func.func @kernel(%arg0: i32, %arg1: memref<2x128xf32, #tpu.memory_space<vmem>>, %arg2: memref<1x128xf32, #tpu.memory_space<vmem>>, %arg3: memref<1x1xf32, #tpu.memory_space<smem>>) attributes {dimension_semantics = [#tpu.dimension_semantics<arbitrary>], iteration_bounds = array<i64: 1>, scalar_prefetch = 0 : i64, scratch_operands = 0 : i64, tpu.core_type = #tpu.core_type<tc>, window_params = [{transform_indices = @transform_0, window_bounds = array<i64: 2, 128>}, {transform_indices = @transform_1, window_bounds = array<i64: 1, 128>}, {transform_indices = @transform_2, window_bounds = array<i64: 1, 1>}]} {
    %c0_i32 = arith.constant 0 : i32
    %0 = arith.cmpi eq, %arg0, %c0_i32 : i32
    %1 = arith.extui %0 : i1 to i32
    %c0_i32_0 = arith.constant 0 : i32
    %2 = arith.cmpi ne, %1, %c0_i32_0 : i32
    scf.if %2 {
      %cst_16 = arith.constant 0.000000e+00 : f32
      %c0_17 = arith.constant 0 : index
      %c0_18 = arith.constant 0 : index
      %47 = memref.load %arg3[%c0_17, %c0_18] : memref<1x1xf32, #tpu.memory_space<smem>>
      memref.store %cst_16, %arg3[%c0_17, %c0_18] : memref<1x1xf32, #tpu.memory_space<smem>>
    } else {
    }
    %c0 = arith.constant 0 : index
    %c0_1 = arith.constant 0 : index
    %3 = vector.load %arg2[%c0, %c0_1] : memref<1x128xf32, #tpu.memory_space<vmem>>, vector<1x128xf32>
    %4 = tpu.iota {dimensions = array<i32: 1>} : vector<1x128xi32>
    %c128_i32 = arith.constant 128 : i32
    %5 = arith.muli %arg0, %c128_i32 : i32
    %6 = vector.broadcast %5 : i32 to vector<1x128xi32>
    %7 = arith.addi %4, %6 : vector<1x128xi32>
    %c8_i32 = arith.constant 8 : i32
    %8 = vector.broadcast %c8_i32 : i32 to vector<1x128xi32>
    %9 = arith.cmpi slt, %7, %8 : vector<1x128xi32>
    %c0_2 = arith.constant 0 : index
    %c0_3 = arith.constant 0 : index
    %10 = vector.load %arg1[%c0_2, %c0_3] : memref<2x128xf32, #tpu.memory_space<vmem>>, vector<1x128xf32>
    %c1 = arith.constant 1 : index
    %c0_4 = arith.constant 0 : index
    %11 = vector.load %arg1[%c1, %c0_4] : memref<2x128xf32, #tpu.memory_space<vmem>>, vector<1x128xf32>
    %12 = arith.subf %10, %3 : vector<1x128xf32>
    %cst = arith.constant -5.000000e+00 : f32
    %13 = vector.broadcast %cst : f32 to vector<1x128xf32>
    %14 = arith.mulf %13, %12 : vector<1x128xf32>
    %15 = arith.addf %10, %3 : vector<1x128xf32>
    %16 = arith.mulf %14, %15 : vector<1x128xf32>
    %17 = arith.cmpf ole, %3, %10 : vector<1x128xf32>
    %18 = arith.extui %17 : vector<1x128xi1> to vector<1x128xi32>
    %19 = arith.sitofp %18 : vector<1x128xi32> to vector<1x128xf32>
    %cst_5 = arith.constant 5.000000e-02 : f32
    %20 = vector.broadcast %cst_5 : f32 to vector<1x128xf32>
    %21 = arith.subf %19, %20 : vector<1x128xf32>
    %22 = arith.mulf %21, %16 : vector<1x128xf32>
    %23 = arith.mulf %11, %19 : vector<1x128xf32>
    %24 = arith.subf %10, %3 : vector<1x128xf32>
    %25 = arith.mulf %23, %24 : vector<1x128xf32>
    %26 = arith.addf %22, %25 : vector<1x128xf32>
    %cst_6 = arith.constant 5.000000e-02 : f32
    %27 = vector.broadcast %cst_6 : f32 to vector<1x128xf32>
    %28 = arith.mulf %27, %11 : vector<1x128xf32>
    %29 = arith.subf %11, %10 : vector<1x128xf32>
    %30 = arith.mulf %28, %29 : vector<1x128xf32>
    %31 = arith.addf %26, %30 : vector<1x128xf32>
    %cst_7 = arith.constant 2.500000e-02 : f32
    %32 = vector.broadcast %cst_7 : f32 to vector<1x128xf32>
    %33 = arith.mulf %32, %11 : vector<1x128xf32>
    %34 = arith.mulf %33, %11 : vector<1x128xf32>
    %35 = arith.subf %31, %34 : vector<1x128xf32>
    %cst_8 = arith.constant 0.000000e+00 : f32
    %36 = vector.broadcast %cst_8 : f32 to vector<1x128xf32>
    %37 = arith.select %9, %35, %36 : vector<1x128xi1>, vector<1x128xf32>
    %38 = vector.shape_cast %37 : vector<1x128xf32> to vector<1x1x128xf32>
    %cst_9 = arith.constant dense<0.000000e+00> : vector<1xf32>
    %39 = vector.multi_reduction <add>, %38, %cst_9 [1, 2] : vector<1x1x128xf32> to vector<1xf32>
    %40 = vector.shape_cast %39 : vector<1xf32> to vector<1x1x1xf32>
    %41 = vector.extract %40[0, 0, 0] : f32 from vector<1x1x1xf32>
    %cst_10 = arith.constant 1.250000e-01 : f32
    %42 = arith.mulf %41, %cst_10 : f32
    %cst_11 = arith.constant 0.000000e+00 : f32
    %43 = arith.addf %cst_11, %42 : f32
    %c0_12 = arith.constant 0 : index
    %c0_13 = arith.constant 0 : index
    %44 = memref.load %arg3[%c0_12, %c0_13] : memref<1x1xf32, #tpu.memory_space<smem>>
    %45 = arith.addf %44, %43 : f32
    %c0_14 = arith.constant 0 : index
    %c0_15 = arith.constant 0 : index
    %46 = memref.load %arg3[%c0_14, %c0_15] : memref<1x1xf32, #tpu.memory_space<smem>>
    memref.store %45, %arg3[%c0_14, %c0_15] : memref<1x1xf32, #tpu.memory_space<smem>>
    return
  }
  func.func @transform_0(%arg0: i32) -> (i32, i32) {
    %c0_i32 = arith.constant 0 : i32
    %c0_i32_0 = arith.constant 0 : i32
    return %c0_i32, %arg0 : i32, i32
  }
  func.func @transform_1(%arg0: i32) -> (i32, i32) {
    %c0_i32 = arith.constant 0 : i32
    %c0_i32_0 = arith.constant 0 : i32
    return %c0_i32, %arg0 : i32, i32
  }
  func.func @transform_2(%arg0: i32) -> (i32, i32) {
    %c0_i32 = arith.constant 0 : i32
    %c0_i32_0 = arith.constant 0 : i32
    %c0_i32_1 = arith.constant 0 : i32
    return %c0_i32, %c0_i32_0 : i32, i32
  }
}

</mosaic_0001>

<llo_original>
// kernel: score_forward.1
$region0: #{score_forward.1}
  #allocation0 [shape = 'u32[]', space=smem, size = 0x4, offset = 0x4, fixed_abs, tag = 'smem constant byte address 0x4 - core index']
  #allocation1 [shape = 'u32[144,128]{1,0:T(1,128)}', space=vmem, size = 0x12000, scoped, tag = 'internal scratch']
  %s0 = inlined_call_operand.vmem [shape: f32[2,128], index: 0, kind: input, shape index: {}]
  %s1 = inlined_call_operand.vmem [shape: f32[1,128], index: 1, kind: input, shape index: {}]
  %s2 = inlined_call_operand.hbm [shape: f32[1,1], index: 2, kind: output, shape index: {}]
  %s3 = sld [smem:[#allocation0]]
  $region22: #{score_forward.1} parent=0
    _
  %s5 = ssub.s32 1, %s3
  %s6 = scalar_select 0, %s5, %s3
  $region1: #{score_forward.1} parent=0
    #allocation2 [shape = 'u8[512]{0}', space=smem, size = 0x200, scoped, tag = 'output window, operand 0, single buffered']
    #allocation3 [shape = 's32[1]{0}', space=sflag, size = 0x4, scoped, tag = 'scoped memory for score_forward.1']
    %7 = vsyncpa [#allocation3], 0
    // Predicated region
    $region2: #{score_forward.1} parent=1 // pred_check
      _
    $region3: #{score_forward.1} parent=1 // pred_check_branch
      %9 = sbr.rel (0) target = $region5
    $region4: #{score_forward.1} parent=1 // pred_region
      _
    $region5: #{score_forward.1} parent=1 // pred_fallthru
      _
    // Predicated region
    $region6: #{score_forward.1} parent=1 // pred_check
      _
    $region7: #{score_forward.1} parent=1 // pred_check_branch
      %11 = sbr.rel (0) target = $region9
    $region8: #{score_forward.1} parent=1 // pred_region
      _
    $region9: #{score_forward.1} parent=1 // pred_fallthru
      _
    %p12 = scmp.eq.s32.totalorder 0, 0
    // Predicated region
    $region10: #{score_forward.1} parent=1 // pred_check
      %p13 = pneg %p12
    $region11: #{score_forward.1} parent=1 // pred_check_branch
      %15 = sbr.rel (%p13) target = $region13
    $region12: #{score_forward.1} parent=1 // pred_region
      %s16 = scalar_lea.smem [#allocation2], 0
      %17 = sst [smem:[%s16]] 0.0
    $region13: #{score_forward.1} parent=1 // pred_fallthru
      _
    %v18 = vld [vmem:[%s1] sm:$0x1]
    %v19 = vlaneseq
    %v20 = vand.u32 %v19, 127
    %s21 = smul.u32 0, 128
    %v22 = vstv %s21
    %v23 = vadd.s32 %v20, %v22
    %vm24 = vcmp.lt.s32.totalorder %v23, 8
    %v25 = vld [vmem:[%s0] sm:$0x1]
    %v26 = vld [vmem:[%s0 + $0x1] sm:$0x1]
    %v27 = vsub.f32 %v25, %v18
    %v28 = vmul.f32 %v27, -5.0
    %v29 = vadd.f32 %v25, %v18
    %v30 = vmul.f32 %v28, %v29
    %vm31 = vcmp.le.f32.partialorder %v18, %v25
    %v32 = vsel %vm31, 1, 0
    %v33 = vcvt.s32.f32 %v32
    %v34 = vsub.f32 %v33, 0.05
    %v35 = vmul.f32 %v34, %v30
    %v36 = vmul.f32 %v26, %v33
    %v37 = vmul.f32 %v36, %v27
    %v38 = vadd.f32 %v35, %v37
    %v39 = vmul.f32 %v26, 0.05
    %v40 = vsub.f32 %v26, %v25
    %v41 = vmul.f32 %v39, %v40
    %v42 = vadd.f32 %v38, %v41
    %v43 = vmul.f32 %v26, 0.025
    %v44 = vmul.f32 %v43, %v26
    %v45 = vsub.f32 %v42, %v44
    %v46 = vsel %vm24, %v45, 0.0
    %vm47 = vcmask 1040384
    %v48 = vsel %vm47, %v46, 0.0
    %49 = vadd.xlane.f32.xlu0 %v48
    %v50 = vpop.xlane.xlu0 %49
    %v51 = vrot.slane %v50, 4
    %v52 = vadd.f32 %v50, %v51
    %v53 = vrot.slane %v52, 2
    %v54 = vadd.f32 %v52, %v53
    %v55 = vrot.slane %v54, 1
    %v56 = vadd.f32 %v54, %v55
    %s57 = vtos %v56
    %s58 = smul.f32 %s57, 0.125
    %s59 = sadd.f32 %s58, 0.0
    %s60 = sld [smem:[#allocation2]]
    %s61 = sadd.f32 %s60, %s59
    %s62 = scalar_lea.smem [#allocation2], 0
    %63 = sst [smem:[%s62]] %s61
    // Predicated region
    $region14: #{score_forward.1} parent=1 // pred_check
      _
    $region15: #{score_forward.1} parent=1 // pred_check_branch
      %65 = sbr.rel (0) target = $region17
    $region16: #{score_forward.1} parent=1 // pred_region
      %s67 = ssub.s32 16, 16
      %68 = vsyncadd [#allocation3], %s67
      %71 = dma.smem_to_hbm [#allocation2], 16, %s2, [#allocation3]
    $region17: #{score_forward.1} parent=1 // pred_fallthru
      _
    // Predicated region
    $region18: #{score_forward.1} parent=1 // pred_check
      _
    $region19: #{score_forward.1} parent=1 // pred_check_branch
      %73 = sbr.rel (0) target = $region21
    $region20: #{score_forward.1} parent=1 // pred_region
      %74 = dma.done [#allocation3], 16
    $region21: #{score_forward.1} parent=1 // pred_fallthru
      _
    %75 = sfence
    %76 = vsyncpa [#allocation3], 1

</llo_original>
